<compile_context>
chip_gen: v7x
topology: tpu7x:2x2x1
jax: 0.10.0
libtpu: 0.0.40
codegen_flags: <defaults>
</compile_context>

<pallas_src>
from functools import partial

import jax
import jax.numpy as jnp
from jax.experimental import pallas as pl
from jax.experimental.pallas import tpu as pltpu


def _rdb_conv_kernel(H, W, Cin, G, x_ref, w_ref, b_ref, out_ref):
    # x_ref  : (N*Cin, HW)       batch of images, pixels row-major on lanes
    # w_ref  : (G, 9*Cin)        conv weight, columns ordered (kh, kw, c)
    # b_ref  : (G, 1)            conv bias
    # out_ref: (N*(Cin+G), HW)   per image: [ x ; relu(conv(x)) ]  (fused cat)
    HW = H * W
    N = x_ref.shape[0] // Cin
    f32 = jnp.float32

    xv = x_ref[...]                                   # (N*Cin, HW), input dtype
    x2 = xv.astype(f32)
    wf = w_ref[...].astype(f32)                       # (G, 9*Cin)
    bias = jnp.broadcast_to(b_ref[...].astype(f32), (G, HW))   # hoisted once

    # Column index of each pixel, built in-kernel (no mask DMA).
    col = jax.lax.broadcasted_iota(jnp.int32, (1, HW), 1) % W

    # Lane-aligned zero halo so every 3x3 tap is a static lane-window slice,
    # plus two pre-masked copies (the border mask depends only on kw):
    #   kw=0 taps can only read source column W-1 out of bounds -> zero it
    #   kw=2 taps can only read source column 0   out of bounds -> zero it
    padn = ((W + 1 + 127) // 128) * 128
    zpad = jnp.zeros((N * Cin, padn), f32)
    x_mid = jnp.concatenate([zpad, x2, zpad], axis=1)
    x_lft = jnp.concatenate([zpad, jnp.where(col == W - 1, 0.0, x2), zpad], axis=1)
    x_rgt = jnp.concatenate([zpad, jnp.where(col == 0, 0.0, x2), zpad], axis=1)
    srcs = (x_lft, x_mid, x_rgt)

    parts = []
    for n in range(N):                                # unrolled: small batch block
        lo = n * Cin
        taps = []
        for kh in range(3):
            for kw in range(3):
                s = (kh - 1) * W + (kw - 1)
                taps.append(srcs[kw][lo:lo + Cin, padn + s:padn + s + HW])
        im2col = jnp.concatenate(taps, axis=0)        # (9*Cin, HW), rows=(kh,kw,c)
        acc = jnp.dot(wf, im2col, preferred_element_type=f32) + bias   # MXU
        acc = jnp.maximum(acc, 0.0)                   # activation = ReLU
        parts.append(xv[lo:lo + Cin, :])              # torch.cat passthrough (x)
        parts.append(acc.astype(out_ref.dtype))       # conv output
    out_ref[...] = jnp.concatenate(parts, axis=0)     # one full-block store


def rdb_conv_forward(x_nchw, weight, bias):
    """RDB_Conv.forward: concat(x, relu(conv2d(x, weight, bias)), dim=1).

    x_nchw : (N, Cin, H, W)  float32
    weight : (G, Cin, 3, 3)  float32 (PyTorch Conv2d layout)
    bias   : (G,)            float32
    returns: (N, Cin + G, H, W)
    """
    N, Cin, H, W = x_nchw.shape
    G = weight.shape[0]
    HW = H * W

    # Free / tiny layout plumbing only: leading-dim merge (N,Cin,H,W)->(N*Cin,HW),
    # a 288-element weight reorder and the bias column.  No pads, image
    # transposes or concats on the image data in HBM.
    x_flat = x_nchw.reshape(N * Cin, HW)
    w2 = jnp.transpose(weight, (0, 2, 3, 1)).reshape(G, 9 * Cin)   # cols=(kh,kw,c)
    b2 = bias.reshape(G, 1)

    # The whole batch fits easily in VMEM at these shapes, so a single grid
    # step processes every image (per-step overhead amortized).
    # TODO(synk): for large N / large images add a batch-chunk and/or H-strip
    # grid axis (2-row halo), mark it "parallel" so v7x's two TensorCores both
    # get work, and size the strips + vmem_limit_bytes for v7x's 64 MiB VMEM.
    out_flat = pl.pallas_call(
        partial(_rdb_conv_kernel, H, W, Cin, G),
        out_shape=jax.ShapeDtypeStruct((N * (Cin + G), HW), x_nchw.dtype),
        grid=(1,),
        in_specs=[
            pl.BlockSpec((N * Cin, HW), lambda i: (0, 0)),
            pl.BlockSpec((G, 9 * Cin), lambda i: (0, 0)),
            pl.BlockSpec((G, 1), lambda i: (0, 0)),
        ],
        out_specs=pl.BlockSpec((N * (Cin + G), HW), lambda i: (0, 0)),
        compiler_params=pltpu.CompilerParams(
            dimension_semantics=("arbitrary",)),
    )(x_flat, w2, b2)

    return out_flat.reshape(N, Cin + G, H, W)


def _reference(x_nchw, weight, bias):
    """Pure-JAX reference (lax conv) for correctness checking."""
    conv = jax.lax.conv_general_dilated(
        x_nchw, weight, window_strides=(1, 1), padding=((1, 1), (1, 1)),
        dimension_numbers=("NCHW", "OIHW", "NCHW"),
        precision=jax.lax.Precision.HIGHEST)
    conv = jax.nn.relu(conv + bias.reshape(1, -1, 1, 1))
    return jnp.concatenate([x_nchw, conv], axis=1)


if __name__ == "__main__":
    # Module config: inChannels=4, growRate=8, activation=ReLU, k_size=3
    N, Cin, H, W, G = 2, 4, 16, 16, 8

    key = jax.random.PRNGKey(0)
    kx, kwt, kb = jax.random.split(key, 3)
    x = jax.random.normal(kx, (N, Cin, H, W), dtype=jnp.float32)
    # Deterministic synthetic parameters (PyTorch Conv2d weight layout: (G,Cin,3,3)).
    weight = 0.1 * jax.random.normal(kwt, (G, Cin, 3, 3), dtype=jnp.float32)
    bias = 0.05 * jax.random.normal(kb, (G,), dtype=jnp.float32)

    out = rdb_conv_forward(x, weight, bias)
    out = jax.block_until_ready(out)

    ref = _reference(x, weight, bias)
    assert out.shape == (N, Cin + G, H, W), out.shape
    assert jnp.allclose(out, ref, atol=1e-4, rtol=1e-4), "mismatch vs reference"

    print("KERNEL_OK")
</pallas_src>

<mosaic_0001>
module attributes {stable_mosaic.version = 11 : i64} {
  func.func @_rdb_conv_kernel(%arg0: i32, %arg1: memref<8x256xf32, #tpu.memory_space<vmem>>, %arg2: memref<8x36xf32, #tpu.memory_space<vmem>>, %arg3: memref<8x1xf32, #tpu.memory_space<vmem>>, %arg4: memref<24x256xf32, #tpu.memory_space<vmem>>) attributes {dimension_semantics = [#tpu.dimension_semantics<arbitrary>], iteration_bounds = array<i64: 1>, scalar_prefetch = 0 : i64, scratch_operands = 0 : i64, tpu.core_type = #tpu.core_type<tc>, window_params = [{pipeline_mode = #tpu.pipeline_mode<synchronous>, transform_indices = @transform_0, window_bounds = array<i64: 8, 256>}, {pipeline_mode = #tpu.pipeline_mode<synchronous>, transform_indices = @transform_1, window_bounds = array<i64: 8, 36>}, {pipeline_mode = #tpu.pipeline_mode<synchronous>, transform_indices = @transform_2, window_bounds = array<i64: 8, 1>}, {pipeline_mode = #tpu.pipeline_mode<synchronous>, transform_indices = @transform_3, window_bounds = array<i64: 24, 256>}]} {
    %c0 = arith.constant 0 : index
    %c0_0 = arith.constant 0 : index
    %0 = vector.load %arg1[%c0, %c0_0] : memref<8x256xf32, #tpu.memory_space<vmem>>, vector<8x256xf32>
    %c0_1 = arith.constant 0 : index
    %c0_2 = arith.constant 0 : index
    %1 = vector.load %arg2[%c0_1, %c0_2] : memref<8x36xf32, #tpu.memory_space<vmem>>, vector<8x36xf32>
    %c0_3 = arith.constant 0 : index
    %c0_4 = arith.constant 0 : index
    %2 = vector.load %arg3[%c0_3, %c0_4] : memref<8x1xf32, #tpu.memory_space<vmem>>, vector<8x1xf32>
    %3 = vector.shape_cast %2 : vector<8x1xf32> to vector<8x1xf32>
    %4 = vector.broadcast %3 : vector<8x1xf32> to vector<8x256xf32>
    %5 = tpu.iota {dimensions = array<i32: 1>} : vector<1x256xi32>
    %c16_i32 = arith.constant 16 : i32
    %c0_i32 = arith.constant 0 : i32
    %6 = arith.cmpi eq, %c16_i32, %c0_i32 : i32
    %c1_i32 = arith.constant 1 : i32
    %7 = arith.select %6, %c1_i32, %c16_i32 : i32
    %8 = vector.broadcast %7 : i32 to vector<1x256xi32>
    %9 = arith.remsi %5, %8 : vector<1x256xi32>
    %c0_i32_5 = arith.constant 0 : i32
    %10 = vector.broadcast %c0_i32_5 : i32 to vector<1x256xi32>
    %11 = arith.cmpi ne, %9, %10 : vector<1x256xi32>
    %c0_i32_6 = arith.constant 0 : i32
    %12 = vector.broadcast %c0_i32_6 : i32 to vector<1x256xi32>
    %13 = arith.cmpi slt, %9, %12 : vector<1x256xi32>
    %c0_i32_7 = arith.constant 0 : i32
    %14 = arith.cmpi slt, %7, %c0_i32_7 : i32
    %15 = vector.broadcast %14 : i1 to vector<1x256xi1>
    %16 = vector.broadcast %15 : vector<1x256xi1> to vector<1x256xi1>
    %17 = arith.xori %13, %16 : vector<1x256xi1>
    %18 = arith.andi %17, %11 : vector<1x256xi1>
    %19 = vector.broadcast %7 : i32 to vector<1x256xi32>
    %20 = arith.addi %9, %19 : vector<1x256xi32>
    %21 = arith.select %18, %20, %9 : vector<1x256xi1>, vector<1x256xi32>
    %cst = arith.constant 0.000000e+00 : f32
    %22 = vector.broadcast %cst : f32 to vector<8x128xf32>
    %23 = tpu.concatenate %22, %0, %22 in 1 : vector<8x128xf32>, vector<8x256xf32>, vector<8x128xf32> -> vector<8x512xf32>
    %c15_i32 = arith.constant 15 : i32
    %24 = vector.broadcast %c15_i32 : i32 to vector<1x256xi32>
    %25 = arith.cmpi eq, %21, %24 : vector<1x256xi32>
    %cst_8 = arith.constant 0.000000e+00 : f32
    %26 = vector.shape_cast %25 : vector<1x256xi1> to vector<1x256xi1>
    %27 = vector.broadcast %26 : vector<1x256xi1> to vector<8x256xi1>
    %28 = vector.broadcast %cst_8 : f32 to vector<8x256xf32>
    %29 = arith.select %27, %28, %0 : vector<8x256xi1>, vector<8x256xf32>
    %30 = tpu.concatenate %22, %29, %22 in 1 : vector<8x128xf32>, vector<8x256xf32>, vector<8x128xf32> -> vector<8x512xf32>
    %c0_i32_9 = arith.constant 0 : i32
    %31 = vector.broadcast %c0_i32_9 : i32 to vector<1x256xi32>
    %32 = arith.cmpi eq, %21, %31 : vector<1x256xi32>
    %cst_10 = arith.constant 0.000000e+00 : f32
    %33 = vector.shape_cast %32 : vector<1x256xi1> to vector<1x256xi1>
    %34 = vector.broadcast %33 : vector<1x256xi1> to vector<8x256xi1>
    %35 = vector.broadcast %cst_10 : f32 to vector<8x256xf32>
    %36 = arith.select %34, %35, %0 : vector<8x256xi1>, vector<8x256xf32>
    %37 = tpu.concatenate %22, %36, %22 in 1 : vector<8x128xf32>, vector<8x256xf32>, vector<8x128xf32> -> vector<8x512xf32>
    %38 = vector.extract_strided_slice %30 {offsets = [0, 111], sizes = [4, 256], strides = [1, 1]} : vector<8x512xf32> to vector<4x256xf32>
    %39 = vector.extract_strided_slice %23 {offsets = [0, 112], sizes = [4, 256], strides = [1, 1]} : vector<8x512xf32> to vector<4x256xf32>
    %40 = vector.extract_strided_slice %37 {offsets = [0, 113], sizes = [4, 256], strides = [1, 1]} : vector<8x512xf32> to vector<4x256xf32>
    %41 = vector.extract_strided_slice %30 {offsets = [0, 127], sizes = [4, 256], strides = [1, 1]} : vector<8x512xf32> to vector<4x256xf32>
    %42 = vector.extract_strided_slice %23 {offsets = [0, 128], sizes = [4, 256], strides = [1, 1]} : vector<8x512xf32> to vector<4x256xf32>
    %43 = vector.extract_strided_slice %37 {offsets = [0, 129], sizes = [4, 256], strides = [1, 1]} : vector<8x512xf32> to vector<4x256xf32>
    %44 = vector.extract_strided_slice %30 {offsets = [0, 143], sizes = [4, 256], strides = [1, 1]} : vector<8x512xf32> to vector<4x256xf32>
    %45 = vector.extract_strided_slice %23 {offsets = [0, 144], sizes = [4, 256], strides = [1, 1]} : vector<8x512xf32> to vector<4x256xf32>
    %46 = vector.extract_strided_slice %37 {offsets = [0, 145], sizes = [4, 256], strides = [1, 1]} : vector<8x512xf32> to vector<4x256xf32>
    %47 = tpu.concatenate %38, %39, %40, %41, %42, %43, %44, %45, %46 in 0 : vector<4x256xf32>, vector<4x256xf32>, vector<4x256xf32>, vector<4x256xf32>, vector<4x256xf32>, vector<4x256xf32>, vector<4x256xf32>, vector<4x256xf32>, vector<4x256xf32> -> vector<36x256xf32>
    %cst_11 = arith.constant dense<0.000000e+00> : vector<8x256xf32>
    %48 = tpu.matmul %1, %47, %cst_11 {dimension_numbers = #tpu.dot_dimension_numbers<[1], [0], [0], [1], [0, 0, 1, 1], [], []>} : vector<8x36xf32>, vector<36x256xf32>, vector<8x256xf32> -> vector<8x256xf32>
    %49 = arith.addf %48, %4 : vector<8x256xf32>
    %cst_12 = arith.constant 0.000000e+00 : f32
    %50 = vector.broadcast %cst_12 : f32 to vector<8x256xf32>
    %51 = arith.maximumf %49, %50 : vector<8x256xf32>
    %52 = vector.extract_strided_slice %0 {offsets = [0, 0], sizes = [4, 256], strides = [1, 1]} : vector<8x256xf32> to vector<4x256xf32>
    %53 = vector.extract_strided_slice %30 {offsets = [4, 111], sizes = [4, 256], strides = [1, 1]} : vector<8x512xf32> to vector<4x256xf32>
    %54 = vector.extract_strided_slice %23 {offsets = [4, 112], sizes = [4, 256], strides = [1, 1]} : vector<8x512xf32> to vector<4x256xf32>
    %55 = vector.extract_strided_slice %37 {offsets = [4, 113], sizes = [4, 256], strides = [1, 1]} : vector<8x512xf32> to vector<4x256xf32>
    %56 = vector.extract_strided_slice %30 {offsets = [4, 127], sizes = [4, 256], strides = [1, 1]} : vector<8x512xf32> to vector<4x256xf32>
    %57 = vector.extract_strided_slice %23 {offsets = [4, 128], sizes = [4, 256], strides = [1, 1]} : vector<8x512xf32> to vector<4x256xf32>
    %58 = vector.extract_strided_slice %37 {offsets = [4, 129], sizes = [4, 256], strides = [1, 1]} : vector<8x512xf32> to vector<4x256xf32>
    %59 = vector.extract_strided_slice %30 {offsets = [4, 143], sizes = [4, 256], strides = [1, 1]} : vector<8x512xf32> to vector<4x256xf32>
    %60 = vector.extract_strided_slice %23 {offsets = [4, 144], sizes = [4, 256], strides = [1, 1]} : vector<8x512xf32> to vector<4x256xf32>
    %61 = vector.extract_strided_slice %37 {offsets = [4, 145], sizes = [4, 256], strides = [1, 1]} : vector<8x512xf32> to vector<4x256xf32>
    %62 = tpu.concatenate %53, %54, %55, %56, %57, %58, %59, %60, %61 in 0 : vector<4x256xf32>, vector<4x256xf32>, vector<4x256xf32>, vector<4x256xf32>, vector<4x256xf32>, vector<4x256xf32>, vector<4x256xf32>, vector<4x256xf32>, vector<4x256xf32> -> vector<36x256xf32>
    %cst_13 = arith.constant dense<0.000000e+00> : vector<8x256xf32>
    %63 = tpu.matmul %1, %62, %cst_13 {dimension_numbers = #tpu.dot_dimension_numbers<[1], [0], [0], [1], [0, 0, 1, 1], [], []>} : vector<8x36xf32>, vector<36x256xf32>, vector<8x256xf32> -> vector<8x256xf32>
    %64 = arith.addf %63, %4 : vector<8x256xf32>
    %cst_14 = arith.constant 0.000000e+00 : f32
    %65 = vector.broadcast %cst_14 : f32 to vector<8x256xf32>
    %66 = arith.maximumf %64, %65 : vector<8x256xf32>
    %67 = vector.extract_strided_slice %0 {offsets = [4, 0], sizes = [4, 256], strides = [1, 1]} : vector<8x256xf32> to vector<4x256xf32>
    %68 = tpu.concatenate %52, %51, %67, %66 in 0 : vector<4x256xf32>, vector<8x256xf32>, vector<4x256xf32>, vector<8x256xf32> -> vector<24x256xf32>
    %c0_15 = arith.constant 0 : index
    %c0_16 = arith.constant 0 : index
    %69 = vector.load %arg4[%c0_15, %c0_16] : memref<24x256xf32, #tpu.memory_space<vmem>>, vector<24x256xf32>
    tpu.vector_store %arg4[%c0_15, %c0_16], %68 {strides = array<i32>} : memref<24x256xf32, #tpu.memory_space<vmem>>, vector<24x256xf32>,
    return
  }
  func.func @transform_0(%arg0: i32) -> (i32, i32) {
    %c0_i32 = arith.constant 0 : i32
    %c0_i32_0 = arith.constant 0 : i32
    %c0_i32_1 = arith.constant 0 : i32
    return %c0_i32, %c0_i32_0 : i32, i32
  }
  func.func @transform_1(%arg0: i32) -> (i32, i32) {
    %c0_i32 = arith.constant 0 : i32
    %c0_i32_0 = arith.constant 0 : i32
    %c0_i32_1 = arith.constant 0 : i32
    return %c0_i32, %c0_i32_0 : i32, i32
  }
  func.func @transform_2(%arg0: i32) -> (i32, i32) {
    %c0_i32 = arith.constant 0 : i32
    %c0_i32_0 = arith.constant 0 : i32
    %c0_i32_1 = arith.constant 0 : i32
    return %c0_i32, %c0_i32_0 : i32, i32
  }
  func.func @transform_3(%arg0: i32) -> (i32, i32) {
    %c0_i32 = arith.constant 0 : i32
    %c0_i32_0 = arith.constant 0 : i32
    %c0_i32_1 = arith.constant 0 : i32
    return %c0_i32, %c0_i32_0 : i32, i32
  }
}

</mosaic_0001>

<llo_original>
// kernel: tpu_custom_call.1
$region0: #{tpu_custom_call.1}
  #allocation0 [shape = 'u32[]', space=smem, size = 0x4, offset = 0x4, fixed_abs, tag = 'smem constant byte address 0x4 - core index']
  #allocation1 [shape = 'u32[144,128]{1,0:T(1,128)}', space=vmem, size = 0x12000, scoped, tag = 'internal scratch']
  %s0 = inlined_call_operand.hbm [shape: f32[8,256], index: 0, kind: input, shape index: {}]
  %s1 = inlined_call_operand.vmem [shape: f32[8,36], index: 1, kind: input, shape index: {}]
  %s2 = inlined_call_operand.vmem [shape: f32[8,1], index: 2, kind: input, shape index: {}]
  %s3 = inlined_call_operand.hbm [shape: f32[24,256], index: 3, kind: output, shape index: {}]
  %s4 = sld [smem:[#allocation0]]
  $region26: #{tpu_custom_call.1} parent=0
    _
  %s6 = ssub.s32 1, %s4
  %s7 = scalar_select 0, %s6, %s4
  $region1: #{tpu_custom_call.1} parent=0
    #allocation2 [shape = 'u8[8192]{0}', space=vmem, size = 0x2000, scoped, tag = 'input window, operand 0, single buffered']
    #allocation3 [shape = 's32[1]{0}', space=sflag, size = 0x4, scoped, tag = 'scoped memory for tpu_custom_call.1']
    #allocation4 [shape = 's32[1]{0}', space=sflag, size = 0x4, scoped, tag = 'scoped memory for tpu_custom_call.1']
    #allocation5 [shape = 'u8[24576]{0}', space=vmem, size = 0x6000, scoped, tag = 'output window, operand 0, single buffered']
    %8 = vsyncpa [#allocation3], 0
    %9 = vsyncpa [#allocation4], 0
    // Predicated region
    $region2: #{tpu_custom_call.1} parent=1 // pred_check
      _
    $region3: #{tpu_custom_call.1} parent=1 // pred_check_branch
      %11 = sbr.rel (0) target = $region5
    $region4: #{tpu_custom_call.1} parent=1 // pred_region
      %s13 = ssub.s32 256, 256
      %14 = vsyncadd [#allocation3], %s13
      %s16 = sshll.u32 [#allocation2], 4
      %s17 = int_to_ptr.vmem [resolvable:$true] %s16
      %19 = dma.hbm_to_vmem [thread:$0]  %s0, 256, %s17, [#allocation3]
    $region5: #{tpu_custom_call.1} parent=1 // pred_fallthru
      _
    // Predicated region
    $region6: #{tpu_custom_call.1} parent=1 // pred_check
      _
    $region7: #{tpu_custom_call.1} parent=1 // pred_check_branch
      %21 = sbr.rel (0) target = $region9
    $region8: #{tpu_custom_call.1} parent=1 // pred_region
      _
    $region9: #{tpu_custom_call.1} parent=1 // pred_fallthru
      _
    // Predicated region
    $region10: #{tpu_custom_call.1} parent=1 // pred_check
      _
    $region11: #{tpu_custom_call.1} parent=1 // pred_check_branch
      %23 = sbr.rel (0) target = $region13
    $region12: #{tpu_custom_call.1} parent=1 // pred_region
      _
    $region13: #{tpu_custom_call.1} parent=1 // pred_fallthru
      _
    // Predicated region
    $region14: #{tpu_custom_call.1} parent=1 // pred_check
      _
    $region15: #{tpu_custom_call.1} parent=1 // pred_check_branch
      %25 = sbr.rel (0) target = $region17
    $region16: #{tpu_custom_call.1} parent=1 // pred_region
      %26 = dma.done [#allocation3], 256
    $region17: #{tpu_custom_call.1} parent=1 // pred_fallthru
      _
    %v27 = vld [vmem:[#allocation2] sm:$0xff]
    %v28 = vld [vmem:[#allocation2 + $0x8] sm:$0xff]
    %v29 = vld [vmem:[%s1] sm:$0xff]
    %v30 = vld [vmem:[%s2] sm:$0xff]
    %32 = vset.pattern.permute.xlu0 0
    %33 = vperm.xlu0 %32, %v30
    %v34 = vpop.permute.xlu0 %33
    %v36 = vlaneseq
    %v37 = vand.u32 %v36, 127
    %v38 = vadd.s32 %v37, 128
    %vm39 = vcmp.lt.s32.totalorder %v37, 0
    %v40 = vsub.s32 0, %v37
    %v41 = vsel %vm39, %v40, %v37
    %v42 = vshrl.u32 %v41, 4
    %v43 = vand.u32 %v41, 15
    %v44 = vsub.s32 0, %v43
    %v45 = vsel %vm39, %v44, %v43
    %vm46 = vcmp.lt.s32.totalorder %v38, 0
    %v47 = vsub.s32 0, %v38
    %v48 = vsel %vm46, %v47, %v38
    %v49 = vshrl.u32 %v48, 4
    %v50 = vand.u32 %v48, 15
    %v51 = vsub.s32 0, %v50
    %v52 = vsel %vm46, %v51, %v50
    %vm53 = vcmp.ne.s32.totalorder %v45, 0
    %vm54 = vcmp.ne.s32.totalorder %v52, 0
    %vm55 = vcmp.lt.s32.totalorder %v45, 0
    %vm56 = vcmp.lt.s32.totalorder %v52, 0
    %vm57 = vmand %vm55, %vm53
    %vm58 = vmand %vm56, %vm54
    %v59 = vadd.s32 %v45, 16
    %v60 = vadd.s32 %v52, 16
    %v61 = vsel %vm57, %v59, %v45
    %v62 = vsel %vm58, %v60, %v52
    %vm63 = vcmp.eq.s32.totalorder %v61, 15
    %vm64 = vcmp.eq.s32.totalorder %v62, 15
    %v65 = vsel %vm63, 1, 0
    %v66 = vsel %vm64, 1, 0
    %vm67 = vcmp.eq.s32.totalorder %v65, 1
    %vm68 = vcmp.eq.s32.totalorder %v66, 1
    %v69 = vsel %vm67, 0.0, %v27
    %v70 = vsel %vm68, 0.0, %v28
    %vm71 = vcmp.eq.s32.totalorder %v61, 0
    %vm72 = vcmp.eq.s32.totalorder %v62, 0
    %v73 = vsel %vm71, 1, 0
    %v74 = vsel %vm72, 1, 0
    %vm75 = vcmp.eq.s32.totalorder %v73, 1
    %vm76 = vcmp.eq.s32.totalorder %v74, 1
    %v77 = vsel %vm75, 0.0, %v27
    %v78 = vsel %vm76, 0.0, %v28
    %v82 = vrot.slane 0.0, 4
    %v83 = vrot.slane %v27, 4
    %v84 = vrot.slane %v28, 4
    %85 = vrot.lane.b32.xlu0 %v82, 127
    %v86 = vpop.permute.xlu0 %85
    %87 = vrot.lane.b32.xlu0 %v83, 127
    %v88 = vpop.permute.xlu0 %87
    %89 = vrot.lane.b32.xlu0 %v84, 127
    %v90 = vpop.permute.xlu0 %89
    %vm91 = vcmask 1039360
    %v92 = vsel %vm91, %v86, %v88
    %v93 = vsel %vm91, %v88, %v90
    %99 = vrot.lane.b32.xlu0 0.0, 126
    %v100 = vpop.permute.xlu0 %99
    %101 = vrot.lane.b32.xlu0 %v77, 126
    %v102 = vpop.permute.xlu0 %101
    %103 = vrot.lane.b32.xlu0 %v78, 126
    %v104 = vpop.permute.xlu0 %103
    %vm105 = vcmask 1031168
    %v106 = vsel %vm105, %v100, %v102
    %v107 = vsel %vm105, %v102, %v104
    %v113 = vrot.slane %v69, 4
    %v114 = vrot.slane %v70, 4
    %115 = vrot.lane.b32.xlu0 %v82, 112
    %v116 = vpop.permute.xlu0 %115
    %117 = vrot.lane.b32.xlu0 %v113, 112
    %v118 = vpop.permute.xlu0 %117
    %119 = vrot.lane.b32.xlu0 %v114, 112
    %v120 = vpop.permute.xlu0 %119
    %vm121 = vcmask 916480
    %v122 = vsel %vm121, %v116, %v118
    %v123 = vsel %vm121, %v118, %v120
    %127 = vrot.lane.b32.xlu0 %v27, 111
    %v128 = vpop.permute.xlu0 %127
    %129 = vrot.lane.b32.xlu0 %v28, 111
    %v130 = vpop.permute.xlu0 %129
    %vm131 = vcmask 908288
    %v132 = vsel %vm131, %v128, %v130
    %v136 = vrot.slane %v77, 4
    %v137 = vrot.slane %v78, 4
    %138 = vrot.lane.b32.xlu0 %v136, 110
    %v139 = vpop.permute.xlu0 %138
    %140 = vrot.lane.b32.xlu0 %v137, 110
    %v141 = vpop.permute.xlu0 %140
    %142 = vrot.lane.b32.xlu0 %v82, 110
    %v143 = vpop.permute.xlu0 %142
    %vm144 = vcmask 900096
    %v145 = vsel %vm144, %v139, %v141
    %v146 = vsel %vm144, %v141, %v143
    %150 = vrot.lane.b32.xlu0 %v69, 96
    %v151 = vpop.permute.xlu0 %150
    %152 = vrot.lane.b32.xlu0 %v70, 96
    %v153 = vpop.permute.xlu0 %152
    %154 = vrot.lane.b32.xlu0 0.0, 96
    %v155 = vpop.permute.xlu0 %154
    %vm156 = vcmask 785408
    %v157 = vsel %vm156, %v151, %v153
    %v158 = vsel %vm156, %v153, %v155
    %162 = vrot.lane.b32.xlu0 %v83, 95
    %v163 = vpop.permute.xlu0 %162
    %164 = vrot.lane.b32.xlu0 %v84, 95
    %v165 = vpop.permute.xlu0 %164
    %166 = vrot.lane.b32.xlu0 %v82, 95
    %v167 = vpop.permute.xlu0 %166
    %vm168 = vcmask 777216
    %v169 = vsel %vm168, %v163, %v165
    %v170 = vsel %vm168, %v165, %v167
    %174 = vrot.lane.b32.xlu0 %v77, 94
    %v175 = vpop.permute.xlu0 %174
    %176 = vrot.lane.b32.xlu0 %v78, 94
    %v177 = vpop.permute.xlu0 %176
    %178 = vrot.lane.b32.xlu0 0.0, 94
    %v179 = vpop.permute.xlu0 %178
    %vm180 = vcmask 769024
    %v181 = vsel %vm180, %v175, %v177
    %v182 = vsel %vm180, %v177, %v179
    %vm183 = vcmask 1043456
    %v184 = vsel %vm183, 0.0, %v92
    %v185 = vsel %vm183, %v69, %v93
    %v186 = vsel %vm183, %v70, %v90
    %v187 = vsel %vm183, %v106, %v122
    %v188 = vsel %vm183, %v107, %v123
    %v189 = vsel %vm183, %v104, %v120
    %v190 = vsel %vm183, %v128, %v139
    %v191 = vsel %vm183, %v132, %v145
    %v192 = vsel %vm183, %v130, %v146
    %v193 = vsel %vm183, %v151, %v163
    %v194 = vsel %vm183, %v157, %v169
    %v195 = vsel %vm183, %v158, %v170
    %208 = vrot.lane.b32.xlu0 %v184, 17
    %v209 = vpop.permute.xlu0 %208
    %210 = vrot.lane.b32.xlu0 %v185, 17
    %v211 = vpop.permute.xlu0 %210
    %212 = vrot.lane.b32.xlu0 %v186, 17
    %v213 = vpop.permute.xlu0 %212
    %214 = vrot.lane.b32.xlu0 %v187, 17
    %v215 = vpop.permute.xlu0 %214
    %216 = vrot.lane.b32.xlu0 %v188, 17
    %v217 = vpop.permute.xlu0 %216
    %218 = vrot.lane.b32.xlu0 %v189, 17
    %v219 = vpop.permute.xlu0 %218
    %220 = vrot.lane.b32.xlu0 %v190, 17
    %v221 = vpop.permute.xlu0 %220
    %222 = vrot.lane.b32.xlu0 %v191, 17
    %v223 = vpop.permute.xlu0 %222
    %224 = vrot.lane.b32.xlu0 %v192, 17
    %v225 = vpop.permute.xlu0 %224
    %226 = vrot.lane.b32.xlu0 %v193, 17
    %v227 = vpop.permute.xlu0 %226
    %228 = vrot.lane.b32.xlu0 %v194, 17
    %v229 = vpop.permute.xlu0 %228
    %230 = vrot.lane.b32.xlu0 %v195, 17
    %v231 = vpop.permute.xlu0 %230
    %232 = vrot.lane.b32.xlu0 %v175, 17
    %v233 = vpop.permute.xlu0 %232
    %234 = vrot.lane.b32.xlu0 %v181, 17
    %v235 = vpop.permute.xlu0 %234
    %236 = vrot.lane.b32.xlu0 %v182, 17
    %v237 = vpop.permute.xlu0 %236
    %vm238 = vcmask 138240
    %v239 = vsel %vm238, %v209, %v211
    %v240 = vsel %vm238, %v211, %v213
    %v241 = vsel %vm238, %v215, %v217
    %v242 = vsel %vm238, %v217, %v219
    %v243 = vsel %vm238, %v221, %v223
    %v244 = vsel %vm238, %v223, %v225
    %v245 = vsel %vm238, %v227, %v229
    %v246 = vsel %vm238, %v229, %v231
    %v247 = vsel %vm238, %v233, %v235
    %v248 = vsel %vm238, %v235, %v237
    %vm257 = vcmask 293888
    %v259 = vsel %vm257, %v29, 0
    %v261 = vsel %vm183, %v247, 0
    %v263 = vsel %vm183, %v248, 0
    %265 = vmatprep.subr.mxu0 %v240
    %266 = vmatpush1.msra.mxu0 %v239
    %267 = vmatprep.subr.mxu0 %v242
    %268 = vmatpush1.msra.mxu0 %v241
    %269 = vmatprep.subr.mxu0 %v244
    %270 = vmatpush1.msra.mxu0 %v243
    %271 = vmatprep.subr.mxu0 %v246
    %272 = vmatpush1.msra.mxu0 %v245
    %273 = vmatprep.subr.mxu0 %v263
    %274 = vmatpush1.msra.mxu0 %v261
    %275 = vmatprep.subr.mxu0 0.0
    %276 = vmatpush1.msra.mxu0 0.0
    %277 = vmatprep.subr.mxu0 0.0
    %278 = vmatpush1.msra.mxu0 0.0
    %279 = vmatprep.subr.mxu0 0.0
    %280 = vmatpush1.msra.mxu0 0.0
    %281 = vmatprep.subr.mxu0 0.0
    %282 = vmatpush1.msra.mxu0 0.0
    %283 = vmatprep.subr.mxu0 0.0
    %284 = vmatpush1.msra.mxu0 0.0
    %285 = vmatprep.subr.mxu0 0.0
    %286 = vmatpush1.msra.mxu0 0.0
    %287 = vmatprep.subr.mxu0 0.0
    %288 = vmatpush1.msra.mxu0 0.0
    %289 = vmatprep.subr.mxu0 0.0
    %290 = vmatpush1.msra.mxu0 0.0
    %291 = vmatprep.subr.mxu0 0.0
    %292 = vmatpush1.msra.mxu0 0.0
    %293 = vmatprep.subr.mxu0 0.0
    %294 = vmatpush1.msra.mxu0 0.0
    %295 = vmatprep.subr.mxu0 0.0
    %296 = vmatpush1.msra.mxu0 0.0
    %297 = vmatprep.subr.mxu0 0.0
    %298 = vmatpush1.msra.mxu0 0.0
    %299 = vmatprep.subr.mxu0 0.0
    %300 = vmatpush1.msra.mxu0 0.0
    %301 = vmatprep.subr.mxu0 0.0
    %302 = vmatpush1.msra.mxu0 0.0
    %303 = vmatprep.subr.mxu0 0.0
    %304 = vmatpush1.msra.mxu0 0.0
    %305 = vmatprep.subr.mxu0 0.0
    %306 = vmatpush1.msra.mxu0 0.0
    %307 = vmatprep.subr.mxu0 0.0
    %308 = vmatpush1.msra.mxu0 0.0
    %309 = vmatprep.subr.mxu0 0.0
    %310 = vmatpush1.msra.mxu0 0.0
    %311 = vmatprep.subr.mxu0 0.0
    %312 = vmatpush1.msra.mxu0 0.0
    %313 = vmatprep.subr.mxu0 0.0
    %314 = vmatpush1.msra.mxu0 0.0
    %315 = vmatprep.subr.mxu0 0.0
    %316 = vmatpush1.msra.mxu0 0.0
    %317 = vmatprep.subr.mxu0 0.0
    %318 = vmatpush1.msra.mxu0 0.0
    %319 = vmatprep.subr.mxu0 0.0
    %320 = vmatpush1.msra.mxu0 0.0
    %321 = vmatprep.subr.mxu0 0.0
    %322 = vmatpush1.msra.mxu0 0.0
    %323 = vmatprep.subr.mxu0 0.0
    %324 = vmatpush1.msra.mxu0 0.0
    %325 = vmatprep.subr.mxu0 0.0
    %326 = vmatpush1.msra.mxu0 0.0
    %327 = vmatprep.subr.mxu0 0.0
    %328 = vmatpush1.msra.mxu0 0.0
    %329 = vmatprep.mubr.f32.mxu0 0.0
    %330 = vmatmul.mubr.f32.gmra.mrb[0].mxu0 %v259
    %v331 = vpop.f32.mrb[0].mxu0
    %v332 = vadd.f32 %v34, %v331
    %v333 = vpop.f32.mrb[0].mxu0
    %v334 = vadd.f32 %v34, %v333
    %335 = vdwg.mxu0
    %v336 = vmax.f32 %v332, 0.0
    %v337 = vmax.f32 %v334, 0.0
    %341 = vrot.lane.b32.xlu0 0.0, 127
    %v342 = vpop.permute.xlu0 %341
    %343 = vrot.lane.b32.xlu0 %v27, 127
    %v344 = vpop.permute.xlu0 %343
    %345 = vrot.lane.b32.xlu0 %v28, 127
    %v346 = vpop.permute.xlu0 %345
    %v347 = vsel %vm91, %v342, %v344
    %v348 = vsel %vm91, %v344, %v346
    %352 = vrot.lane.b32.xlu0 %v82, 126
    %v353 = vpop.permute.xlu0 %352
    %354 = vrot.lane.b32.xlu0 %v136, 126
    %v355 = vpop.permute.xlu0 %354
    %356 = vrot.lane.b32.xlu0 %v137, 126
    %v357 = vpop.permute.xlu0 %356
    %v358 = vsel %vm105, %v353, %v355
    %v359 = vsel %vm105, %v355, %v357
    %363 = vrot.lane.b32.xlu0 0.0, 112
    %v364 = vpop.permute.xlu0 %363
    %365 = vrot.lane.b32.xlu0 %v69, 112
    %v366 = vpop.permute.xlu0 %365
    %367 = vrot.lane.b32.xlu0 %v70, 112
    %v368 = vpop.permute.xlu0 %367
    %v369 = vsel %vm121, %v364, %v366
    %v370 = vsel %vm121, %v366, %v368
    %374 = vrot.lane.b32.xlu0 %v83, 111
    %v375 = vpop.permute.xlu0 %374
    %376 = vrot.lane.b32.xlu0 %v84, 111
    %v377 = vpop.permute.xlu0 %376
    %v378 = vsel %vm131, %v375, %v377
    %382 = vrot.lane.b32.xlu0 %v77, 110
    %v383 = vpop.permute.xlu0 %382
    %384 = vrot.lane.b32.xlu0 %v78, 110
    %v385 = vpop.permute.xlu0 %384
    %386 = vrot.lane.b32.xlu0 0.0, 110
    %v387 = vpop.permute.xlu0 %386
    %v388 = vsel %vm144, %v383, %v385
    %v389 = vsel %vm144, %v385, %v387
    %393 = vrot.lane.b32.xlu0 %v113, 96
    %v394 = vpop.permute.xlu0 %393
    %395 = vrot.lane.b32.xlu0 %v114, 96
    %v396 = vpop.permute.xlu0 %395
    %397 = vrot.lane.b32.xlu0 %v82, 96
    %v398 = vpop.permute.xlu0 %397
    %v399 = vsel %vm156, %v394, %v396
    %v400 = vsel %vm156, %v396, %v398
    %404 = vrot.lane.b32.xlu0 %v27, 95
    %v405 = vpop.permute.xlu0 %404
    %406 = vrot.lane.b32.xlu0 %v28, 95
    %v407 = vpop.permute.xlu0 %406
    %408 = vrot.lane.b32.xlu0 0.0, 95
    %v409 = vpop.permute.xlu0 %408
    %v410 = vsel %vm168, %v405, %v407
    %v411 = vsel %vm168, %v407, %v409
    %415 = vrot.lane.b32.xlu0 %v136, 94
    %v416 = vpop.permute.xlu0 %415
    %417 = vrot.lane.b32.xlu0 %v137, 94
    %v418 = vpop.permute.xlu0 %417
    %419 = vrot.lane.b32.xlu0 %v82, 94
    %v420 = vpop.permute.xlu0 %419
    %v421 = vsel %vm180, %v416, %v418
    %v422 = vsel %vm180, %v418, %v420
    %v423 = vsel %vm183, %v82, %v347
    %v424 = vsel %vm183, %v113, %v348
    %v425 = vsel %vm183, %v114, %v346
    %v426 = vsel %vm183, %v358, %v369
    %v427 = vsel %vm183, %v359, %v370
    %v428 = vsel %vm183, %v357, %v368
    %v429 = vsel %vm183, %v375, %v383
    %v430 = vsel %vm183, %v378, %v388
    %v431 = vsel %vm183, %v377, %v389
    %v432 = vsel %vm183, %v394, %v405
    %v433 = vsel %vm183, %v399, %v410
    %v434 = vsel %vm183, %v400, %v411
    %447 = vrot.lane.b32.xlu0 %v423, 17
    %v448 = vpop.permute.xlu0 %447
    %449 = vrot.lane.b32.xlu0 %v424, 17
    %v450 = vpop.permute.xlu0 %449
    %451 = vrot.lane.b32.xlu0 %v425, 17
    %v452 = vpop.permute.xlu0 %451
    %453 = vrot.lane.b32.xlu0 %v426, 17
    %v454 = vpop.permute.xlu0 %453
    %455 = vrot.lane.b32.xlu0 %v427, 17
    %v456 = vpop.permute.xlu0 %455
    %457 = vrot.lane.b32.xlu0 %v428, 17
    %v458 = vpop.permute.xlu0 %457
    %459 = vrot.lane.b32.xlu0 %v429, 17
    %v460 = vpop.permute.xlu0 %459
    %461 = vrot.lane.b32.xlu0 %v430, 17
    %v462 = vpop.permute.xlu0 %461
    %463 = vrot.lane.b32.xlu0 %v431, 17
    %v464 = vpop.permute.xlu0 %463
    %465 = vrot.lane.b32.xlu0 %v432, 17
    %v466 = vpop.permute.xlu0 %465
    %467 = vrot.lane.b32.xlu0 %v433, 17
    %v468 = vpop.permute.xlu0 %467
    %469 = vrot.lane.b32.xlu0 %v434, 17
    %v470 = vpop.permute.xlu0 %469
    %471 = vrot.lane.b32.xlu0 %v416, 17
    %v472 = vpop.permute.xlu0 %471
    %473 = vrot.lane.b32.xlu0 %v421, 17
    %v474 = vpop.permute.xlu0 %473
    %475 = vrot.lane.b32.xlu0 %v422, 17
    %v476 = vpop.permute.xlu0 %475
    %v477 = vsel %vm238, %v448, %v450
    %v478 = vsel %vm238, %v450, %v452
    %v479 = vsel %vm238, %v454, %v456
    %v480 = vsel %vm238, %v456, %v458
    %v481 = vsel %vm238, %v460, %v462
    %v482 = vsel %vm238, %v462, %v464
    %v483 = vsel %vm238, %v466, %v468
    %v484 = vsel %vm238, %v468, %v470
    %v485 = vsel %vm238, %v472, %v474
    %v486 = vsel %vm238, %v474, %v476
    %v495 = vsel %vm183, %v485, 0
    %v497 = vsel %vm183, %v486, 0
    %499 = vmatprep.subr.mxu0 %v478
    %500 = vmatpush1.msra.mxu0 %v477
    %501 = vmatprep.subr.mxu0 %v480
    %502 = vmatpush1.msra.mxu0 %v479
    %503 = vmatprep.subr.mxu0 %v482
    %504 = vmatpush1.msra.mxu0 %v481
    %505 = vmatprep.subr.mxu0 %v484
    %506 = vmatpush1.msra.mxu0 %v483
    %507 = vmatprep.subr.mxu0 %v497
    %508 = vmatpush1.msra.mxu0 %v495
    %509 = vmatprep.subr.mxu0 0.0
    %510 = vmatpush1.msra.mxu0 0.0
    %511 = vmatprep.subr.mxu0 0.0
    %512 = vmatpush1.msra.mxu0 0.0
    %513 = vmatprep.subr.mxu0 0.0
    %514 = vmatpush1.msra.mxu0 0.0
    %515 = vmatprep.subr.mxu0 0.0
    %516 = vmatpush1.msra.mxu0 0.0
    %517 = vmatprep.subr.mxu0 0.0
    %518 = vmatpush1.msra.mxu0 0.0
    %519 = vmatprep.subr.mxu0 0.0
    %520 = vmatpush1.msra.mxu0 0.0
    %521 = vmatprep.subr.mxu0 0.0
    %522 = vmatpush1.msra.mxu0 0.0
    %523 = vmatprep.subr.mxu0 0.0
    %524 = vmatpush1.msra.mxu0 0.0
    %525 = vmatprep.subr.mxu0 0.0
    %526 = vmatpush1.msra.mxu0 0.0
    %527 = vmatprep.subr.mxu0 0.0
    %528 = vmatpush1.msra.mxu0 0.0
    %529 = vmatprep.subr.mxu0 0.0
    %530 = vmatpush1.msra.mxu0 0.0
    %531 = vmatprep.subr.mxu0 0.0
    %532 = vmatpush1.msra.mxu0 0.0
    %533 = vmatprep.subr.mxu0 0.0
    %534 = vmatpush1.msra.mxu0 0.0
    %535 = vmatprep.subr.mxu0 0.0
    %536 = vmatpush1.msra.mxu0 0.0
    %537 = vmatprep.subr.mxu0 0.0
    %538 = vmatpush1.msra.mxu0 0.0
    %539 = vmatprep.subr.mxu0 0.0
    %540 = vmatpush1.msra.mxu0 0.0
    %541 = vmatprep.subr.mxu0 0.0
    %542 = vmatpush1.msra.mxu0 0.0
    %543 = vmatprep.subr.mxu0 0.0
    %544 = vmatpush1.msra.mxu0 0.0
    %545 = vmatprep.subr.mxu0 0.0
    %546 = vmatpush1.msra.mxu0 0.0
    %547 = vmatprep.subr.mxu0 0.0
    %548 = vmatpush1.msra.mxu0 0.0
    %549 = vmatprep.subr.mxu0 0.0
    %550 = vmatpush1.msra.mxu0 0.0
    %551 = vmatprep.subr.mxu0 0.0
    %552 = vmatpush1.msra.mxu0 0.0
    %553 = vmatprep.subr.mxu0 0.0
    %554 = vmatpush1.msra.mxu0 0.0
    %555 = vmatprep.subr.mxu0 0.0
    %556 = vmatpush1.msra.mxu0 0.0
    %557 = vmatprep.subr.mxu0 0.0
    %558 = vmatpush1.msra.mxu0 0.0
    %559 = vmatprep.subr.mxu0 0.0
    %560 = vmatpush1.msra.mxu0 0.0
    %561 = vmatprep.subr.mxu0 0.0
    %562 = vmatpush1.msra.mxu0 0.0
    %563 = vmatprep.mubr.f32.mxu0 0.0
    %564 = vmatmul.mubr.f32.gmra.mrb[0].mxu0 %v259
    %v565 = vpop.f32.mrb[0].mxu0
    %v566 = vadd.f32 %v34, %v565
    %v567 = vpop.f32.mrb[0].mxu0
    %v568 = vadd.f32 %v34, %v567
    %569 = vdwg.mxu0
    %v570 = vmax.f32 %v566, 0.0
    %v571 = vmax.f32 %v568, 0.0
    %v574 = vrot.slane %v336, 4
    %v575 = vrot.slane %v337, 4
    %v578 = vsel %vm183, %v27, %v574
    %v579 = vsel %vm183, %v28, %v575
    %v580 = vsel %vm183, %v574, %v27
    %v581 = vsel %vm183, %v575, %v28
    %582 = vst [vmem:[#allocation5] sm:$0xff] %v578
    %583 = vst [vmem:[#allocation5 + $0x8] sm:$0xff] %v579
    %584 = vst [vmem:[#allocation5 + $0x10] sm:$0xff] %v580
    %585 = vst [vmem:[#allocation5 + $0x18] sm:$0xff] %v581
    %586 = vst [vmem:[#allocation5 + $0x20] sm:$0xff] %v570
    %587 = vst [vmem:[#allocation5 + $0x28] sm:$0xff] %v571
    // Predicated region
    $region18: #{tpu_custom_call.1} parent=1 // pred_check
      _
    $region19: #{tpu_custom_call.1} parent=1 // pred_check_branch
      %589 = sbr.rel (0) target = $region21
    $region20: #{tpu_custom_call.1} parent=1 // pred_region
      %s591 = ssub.s32 768, 768
      %592 = vsyncadd [#allocation4], %s591
      %s593 = sshll.u32 [#allocation5], 4
      %s594 = int_to_ptr.vmem [resolvable:$true] %s593
      %599 = dma.vmem_to_hbm [thread:$0]  %s594, 768, %s3, [#allocation4], 256, 256, 16
    $region21: #{tpu_custom_call.1} parent=1 // pred_fallthru
      _
    // Predicated region
    $region22: #{tpu_custom_call.1} parent=1 // pred_check
      _
    $region23: #{tpu_custom_call.1} parent=1 // pred_check_branch
      %601 = sbr.rel (0) target = $region25
    $region24: #{tpu_custom_call.1} parent=1 // pred_region
      %602 = dma.done [#allocation4], 768
    $region25: #{tpu_custom_call.1} parent=1 // pred_fallthru
      _
    %603 = vsyncpa [#allocation3], 1
    %604 = vsyncpa [#allocation4], 1

</llo_original>
